<compile_context>
chip_gen: v7x
topology: tpu7x:2x2x1
jax: 0.10.0
libtpu: 0.0.40
codegen_flags: <defaults>
</compile_context>

<pallas_src>
import jax
import jax.numpy as jnp
from jax.experimental import pallas as pl
from jax.experimental.pallas import tpu as pltpu


def crossnet_kernel(x0_ref, w_ref, b_ref, out_ref):
    # x0_ref / out_ref : (TB, D)  -- streamed batch-row tile, features on lanes
    # w_ref / b_ref    : (L, D)   -- resident (constant block index) across grid
    x0 = x0_ref[...].astype(jnp.float32)
    num_layers = w_ref.shape[0]

    xi = x0
    for l in range(num_layers):                       # static unroll, static slices
        w = w_ref[l:l + 1, :].astype(jnp.float32)     # (1, D)
        b = b_ref[l:l + 1, :].astype(jnp.float32)     # (1, D)
        # (xi . w): lane-axis reduce (XLU slot), f32 accumulation.
        s = jnp.sum(xi * w, axis=-1, keepdims=True)   # (TB, 1)
        xi = x0 * s + b + xi                          # (TB, D)

    out_ref[...] = xi.astype(out_ref.dtype)


_SUBLANE = 8


def _vmem_limit_bytes():
    """Generation-aware scoped-VMEM request (v5e/v6e: 128 MiB physical,
    v7x: 64 MiB per TensorCore).  ~70% of capacity, capped at 96 MiB."""
    try:
        cap = pltpu.get_tpu_info().vmem_capacity_bytes
    except Exception:
        cap = 64 << 20                       # conservative fallback (v7x-sized)
    return int(min(int(cap * 0.70), 96 << 20))


def _round_down8(x):
    return max(_SUBLANE, (x // _SUBLANE) * _SUBLANE)


def _pick_batch_tile(batch, in_dim, itemsize, vmem_limit):
    """Rows per streamed tile: MiB-scale (amortizes ~0.35us/step overhead),
    within the VMEM budget (4 pipeline buffers + live f32 intermediates), and
    small enough that large batches get >= 4 grid steps (pipelining + megacore)."""
    # Per-row VMEM bytes: (x0 + out) double-buffered at the I/O dtype, plus the
    # ~3 f32 row-copies (x0, xi, temp) the unrolled layer loop keeps live.
    bytes_per_row = in_dim * (4 * itemsize + 3 * 4)
    budget = int(vmem_limit * 0.85)
    cap_rows = _round_down8(budget // max(bytes_per_row, 1))

    # Target ~4 MiB per streamed input tile.
    target_rows = _round_down8((4 << 20) // max(in_dim * itemsize, 1))

    tb = min(cap_rows, target_rows)

    if batch <= tb:
        # Whole batch fits one tile.  Only split if it is big enough that
        # pipelining / both-TensorCore sharding actually pays off.
        if batch * in_dim * itemsize >= (4 << 20) and batch >= 4 * _SUBLANE:
            return _round_down8(pl.cdiv(batch, 4))
        return batch                          # full-extent block (always legal)

    if pl.cdiv(batch, tb) < 4 and batch >= 4 * _SUBLANE:
        tb = _round_down8(pl.cdiv(batch, 4))
    return tb


def crossnet_pallas(x0, w_stack, b_stack, *, tile_rows=None):
    """x0: (B, D); w_stack, b_stack: (L, D).  Returns (B, D) in x0.dtype."""
    x0 = jnp.asarray(x0)
    w_stack = jnp.asarray(w_stack)
    b_stack = jnp.asarray(b_stack)
    B, D = x0.shape
    L = w_stack.shape[0]
    assert w_stack.shape == (L, D) and b_stack.shape == (L, D)

    vmem_limit = _vmem_limit_bytes()
    tb = tile_rows if tile_rows is not None else _pick_batch_tile(
        B, D, x0.dtype.itemsize, vmem_limit)
    tb = min(tb, B)
    grid = (pl.cdiv(B, tb),)

    return pl.pallas_call(
        crossnet_kernel,
        out_shape=jax.ShapeDtypeStruct((B, D), x0.dtype),
        grid=grid,
        in_specs=[
            pl.BlockSpec((tb, D), lambda i: (i, 0)),    # streamed batch-row tile
            pl.BlockSpec((L, D), lambda i: (0, 0)),     # params stay resident
            pl.BlockSpec((L, D), lambda i: (0, 0)),
        ],
        out_specs=pl.BlockSpec((tb, D), lambda i: (i, 0)),
        compiler_params=pltpu.CompilerParams(
            dimension_semantics=("parallel",),          # megacore sharding on v7x
            vmem_limit_bytes=vmem_limit,
        ),
    )(x0, w_stack, b_stack)


def crossnet_ref(x0, w_stack, b_stack):
    # Pure-JAX mirror of the PyTorch forward: explicit (B, D, D) outer product,
    # kept as elementwise ops + f32 sum (avoids TPU default matmul precision).
    xi = x0
    for l in range(w_stack.shape[0]):
        x0xi = x0[:, :, None] * xi[:, None, :]                   # (B, D, D)
        proj = jnp.sum(x0xi * w_stack[l][None, None, :], axis=-1)  # (B, D)
        xi = proj + b_stack[l][None, :] + xi
    return xi


def _make_params(key, in_dim, cross_order):
    kb, *kws = jax.random.split(key, 1 + cross_order)
    bound = (6.0 / (in_dim + 1)) ** 0.5         # xavier_uniform for a (D, 1) weight
    w = jnp.stack(
        [jax.random.uniform(k, (in_dim,), jnp.float32, -bound, bound) for k in kws]
    )                                           # (L, D)
    b = 0.1 * jax.random.normal(kb, (cross_order, in_dim), dtype=jnp.float32)
    return w, b


if __name__ == "__main__":
    key = jax.random.PRNGKey(0)

    # (batch, in_dim, cross_order, forced tile_rows or None)
    cases = [
        (8, 16, 3, None),     # tiny, single full-extent block
        (200, 32, 2, 48),     # ragged last block (200 % 48 != 0), multi-step grid
        (128, 256, 4, 32),    # lane-dense D >= 128, 4-step grid (megacore path)
    ]
    for idx, (B, D, L, tr) in enumerate(cases):
        kx, kp = jax.random.split(jax.random.fold_in(key, idx))
        x0 = jax.random.normal(kx, (B, D), dtype=jnp.float32)
        w_stack, b_stack = _make_params(kp, D, L)

        out = crossnet_pallas(x0, w_stack, b_stack, tile_rows=tr)
        jax.block_until_ready(out)

        ref = crossnet_ref(x0, w_stack, b_stack)
        assert out.shape == (B, D)
        assert jnp.allclose(out, ref, atol=1e-4, rtol=1e-4), (
            f"mismatch vs reference for case {idx}: {(B, D, L, tr)}")

    print("KERNEL_OK")
</pallas_src>

<mosaic_0001>
module attributes {stable_mosaic.version = 11 : i64} {
  func.func @crossnet_kernel(%arg0: i32, %arg1: memref<8x16xf32, #tpu.memory_space<vmem>>, %arg2: memref<3x16xf32, #tpu.memory_space<vmem>>, %arg3: memref<3x16xf32, #tpu.memory_space<vmem>>, %arg4: memref<8x16xf32, #tpu.memory_space<vmem>>) attributes {dimension_semantics = [#tpu.dimension_semantics<parallel>], iteration_bounds = array<i64: 1>, scalar_prefetch = 0 : i64, scratch_operands = 0 : i64, tpu.core_type = #tpu.core_type<tc>, window_params = [{transform_indices = @transform_0, window_bounds = array<i64: 8, 16>}, {pipeline_mode = #tpu.pipeline_mode<synchronous>, transform_indices = @transform_1, window_bounds = array<i64: 3, 16>}, {pipeline_mode = #tpu.pipeline_mode<synchronous>, transform_indices = @transform_2, window_bounds = array<i64: 3, 16>}, {transform_indices = @transform_3, window_bounds = array<i64: 8, 16>}]} {
    %c0 = arith.constant 0 : index
    %c0_0 = arith.constant 0 : index
    %0 = vector.load %arg1[%c0, %c0_0] : memref<8x16xf32, #tpu.memory_space<vmem>>, vector<8x16xf32>
    %c0_1 = arith.constant 0 : index
    %c0_2 = arith.constant 0 : index
    %1 = vector.load %arg2[%c0_1, %c0_2] : memref<3x16xf32, #tpu.memory_space<vmem>>, vector<1x16xf32>
    %c0_3 = arith.constant 0 : index
    %c0_4 = arith.constant 0 : index
    %2 = vector.load %arg3[%c0_3, %c0_4] : memref<3x16xf32, #tpu.memory_space<vmem>>, vector<1x16xf32>
    %3 = vector.broadcast %1 : vector<1x16xf32> to vector<8x16xf32>
    %4 = arith.mulf %0, %3 : vector<8x16xf32>
    %cst = arith.constant dense<0.000000e+00> : vector<8xf32>
    %5 = vector.multi_reduction <add>, %4, %cst [1] : vector<8x16xf32> to vector<8xf32>
    %6 = vector.shape_cast %5 : vector<8xf32> to vector<8x1xf32>
    %7 = vector.broadcast %6 : vector<8x1xf32> to vector<8x16xf32>
    %8 = arith.mulf %0, %7 : vector<8x16xf32>
    %9 = vector.broadcast %2 : vector<1x16xf32> to vector<8x16xf32>
    %10 = arith.addf %8, %9 : vector<8x16xf32>
    %11 = arith.addf %10, %0 : vector<8x16xf32>
    %c1 = arith.constant 1 : index
    %c0_5 = arith.constant 0 : index
    %12 = vector.load %arg2[%c1, %c0_5] : memref<3x16xf32, #tpu.memory_space<vmem>>, vector<1x16xf32>
    %c1_6 = arith.constant 1 : index
    %c0_7 = arith.constant 0 : index
    %13 = vector.load %arg3[%c1_6, %c0_7] : memref<3x16xf32, #tpu.memory_space<vmem>>, vector<1x16xf32>
    %14 = vector.broadcast %12 : vector<1x16xf32> to vector<8x16xf32>
    %15 = arith.mulf %11, %14 : vector<8x16xf32>
    %cst_8 = arith.constant dense<0.000000e+00> : vector<8xf32>
    %16 = vector.multi_reduction <add>, %15, %cst_8 [1] : vector<8x16xf32> to vector<8xf32>
    %17 = vector.shape_cast %16 : vector<8xf32> to vector<8x1xf32>
    %18 = vector.broadcast %17 : vector<8x1xf32> to vector<8x16xf32>
    %19 = arith.mulf %0, %18 : vector<8x16xf32>
    %20 = vector.broadcast %13 : vector<1x16xf32> to vector<8x16xf32>
    %21 = arith.addf %19, %20 : vector<8x16xf32>
    %22 = arith.addf %21, %11 : vector<8x16xf32>
    %c2 = arith.constant 2 : index
    %c0_9 = arith.constant 0 : index
    %23 = vector.load %arg2[%c2, %c0_9] : memref<3x16xf32, #tpu.memory_space<vmem>>, vector<1x16xf32>
    %c2_10 = arith.constant 2 : index
    %c0_11 = arith.constant 0 : index
    %24 = vector.load %arg3[%c2_10, %c0_11] : memref<3x16xf32, #tpu.memory_space<vmem>>, vector<1x16xf32>
    %25 = vector.broadcast %23 : vector<1x16xf32> to vector<8x16xf32>
    %26 = arith.mulf %22, %25 : vector<8x16xf32>
    %cst_12 = arith.constant dense<0.000000e+00> : vector<8xf32>
    %27 = vector.multi_reduction <add>, %26, %cst_12 [1] : vector<8x16xf32> to vector<8xf32>
    %28 = vector.shape_cast %27 : vector<8xf32> to vector<8x1xf32>
    %29 = vector.broadcast %28 : vector<8x1xf32> to vector<8x16xf32>
    %30 = arith.mulf %0, %29 : vector<8x16xf32>
    %31 = vector.broadcast %24 : vector<1x16xf32> to vector<8x16xf32>
    %32 = arith.addf %30, %31 : vector<8x16xf32>
    %33 = arith.addf %32, %22 : vector<8x16xf32>
    %c0_13 = arith.constant 0 : index
    %c0_14 = arith.constant 0 : index
    %34 = vector.load %arg4[%c0_13, %c0_14] : memref<8x16xf32, #tpu.memory_space<vmem>>, vector<8x16xf32>
    tpu.vector_store %arg4[%c0_13, %c0_14], %33 {strides = array<i32>} : memref<8x16xf32, #tpu.memory_space<vmem>>, vector<8x16xf32>,
    return
  }
  func.func @transform_0(%arg0: i32) -> (i32, i32) {
    %c0_i32 = arith.constant 0 : i32
    %c0_i32_0 = arith.constant 0 : i32
    return %arg0, %c0_i32 : i32, i32
  }
  func.func @transform_1(%arg0: i32) -> (i32, i32) {
    %c0_i32 = arith.constant 0 : i32
    %c0_i32_0 = arith.constant 0 : i32
    %c0_i32_1 = arith.constant 0 : i32
    return %c0_i32, %c0_i32_0 : i32, i32
  }
  func.func @transform_2(%arg0: i32) -> (i32, i32) {
    %c0_i32 = arith.constant 0 : i32
    %c0_i32_0 = arith.constant 0 : i32
    %c0_i32_1 = arith.constant 0 : i32
    return %c0_i32, %c0_i32_0 : i32, i32
  }
  func.func @transform_3(%arg0: i32) -> (i32, i32) {
    %c0_i32 = arith.constant 0 : i32
    %c0_i32_0 = arith.constant 0 : i32
    return %arg0, %c0_i32 : i32, i32
  }
}

</mosaic_0001>

<llo_original>
// kernel: tpu_custom_call.1
$region0: #{tpu_custom_call.1}
  #allocation0 [shape = 'u32[]', space=smem, size = 0x4, offset = 0x4, fixed_abs, tag = 'smem constant byte address 0x4 - core index']
  #allocation1 [shape = 'u32[144,128]{1,0:T(1,128)}', space=vmem, size = 0x12000, scoped, tag = 'internal scratch']
  %s0 = inlined_call_operand.hbm [shape: f32[8,16], index: 0, kind: input, shape index: {}]
  %s1 = inlined_call_operand.hbm [shape: f32[3,16], index: 1, kind: input, shape index: {}]
  %s2 = inlined_call_operand.vmem [shape: f32[3,16], index: 2, kind: input, shape index: {}]
  %s3 = inlined_call_operand.hbm [shape: f32[8,16], index: 3, kind: output, shape index: {}]
  %s4 = sld [smem:[#allocation0]]
  $region30: #{tpu_custom_call.1} parent=0
    _
  %s6 = ssub.s32 1, %s4
  %s7 = scalar_select 0, %s6, %s4
  $region1: #{tpu_custom_call.1} parent=0
    #allocation2 [shape = 'u8[4096]{0}', space=vmem, size = 0x1000, scoped, tag = 'input window, operand 0, single buffered']
    #allocation3 [shape = 's32[1]{0}', space=sflag, size = 0x4, scoped, tag = 'scoped memory for tpu_custom_call.1']
    #allocation4 [shape = 's32[1]{0}', space=sflag, size = 0x4, scoped, tag = 'scoped memory for tpu_custom_call.1']
    #allocation5 [shape = 'u8[2048]{0}', space=vmem, size = 0x800, scoped, tag = 'input window, operand 1, single buffered']
    #allocation6 [shape = 's32[1]{0}', space=sflag, size = 0x4, scoped, tag = 'scoped memory for tpu_custom_call.1']
    #allocation7 [shape = 'u8[4096]{0}', space=vmem, size = 0x1000, scoped, tag = 'output window, operand 0, single buffered']
    %8 = vsyncpa [#allocation3], 0
    %9 = vsyncpa [#allocation6], 0
    %10 = vsyncpa [#allocation4], 0
    // Predicated region
    $region2: #{tpu_custom_call.1} parent=1 // pred_check
      _
    $region3: #{tpu_custom_call.1} parent=1 // pred_check_branch
      %12 = sbr.rel (0) target = $region5
    $region4: #{tpu_custom_call.1} parent=1 // pred_region
      %s14 = ssub.s32 128, 128
      %15 = vsyncadd [#allocation3], %s14
      %s17 = sshll.u32 [#allocation2], 4
      %s18 = int_to_ptr.vmem [resolvable:$true] %s17
      %20 = dma.hbm_to_vmem [thread:$0]  %s0, 128, %s18, [#allocation3]
    $region5: #{tpu_custom_call.1} parent=1 // pred_fallthru
      _
    // Predicated region
    $region6: #{tpu_custom_call.1} parent=1 // pred_check
      _
    $region7: #{tpu_custom_call.1} parent=1 // pred_check_branch
      %22 = sbr.rel (0) target = $region9
    $region8: #{tpu_custom_call.1} parent=1 // pred_region
      %s24 = ssub.s32 64, 64
      %25 = vsyncadd [#allocation6], %s24
      %s27 = sshll.u32 [#allocation5], 4
      %s28 = int_to_ptr.vmem [resolvable:$true] %s27
      %30 = dma.hbm_to_vmem [thread:$0]  %s1, 64, %s28, [#allocation6]
    $region9: #{tpu_custom_call.1} parent=1 // pred_fallthru
      _
    // Predicated region
    $region10: #{tpu_custom_call.1} parent=1 // pred_check
      _
    $region11: #{tpu_custom_call.1} parent=1 // pred_check_branch
      %32 = sbr.rel (0) target = $region13
    $region12: #{tpu_custom_call.1} parent=1 // pred_region
      _
    $region13: #{tpu_custom_call.1} parent=1 // pred_fallthru
      _
    // Predicated region
    $region14: #{tpu_custom_call.1} parent=1 // pred_check
      _
    $region15: #{tpu_custom_call.1} parent=1 // pred_check_branch
      %34 = sbr.rel (0) target = $region17
    $region16: #{tpu_custom_call.1} parent=1 // pred_region
      %35 = dma.done [#allocation3], 128
    $region17: #{tpu_custom_call.1} parent=1 // pred_fallthru
      _
    // Predicated region
    $region18: #{tpu_custom_call.1} parent=1 // pred_check
      _
    $region19: #{tpu_custom_call.1} parent=1 // pred_check_branch
      %37 = sbr.rel (0) target = $region21
    $region20: #{tpu_custom_call.1} parent=1 // pred_region
      %38 = dma.done [#allocation6], 64
    $region21: #{tpu_custom_call.1} parent=1 // pred_fallthru
      _
    %v39 = vld [vmem:[#allocation2] sm:$0xff]
    %v40 = vld [vmem:[#allocation5] sm:$0x1]
    %v41 = vld [vmem:[%s2] sm:$0x1]
    %v42 = vlaneseq
    %v43 = vshrl.u32 %v42, 7
    %v44 = vsub.s32 0, %v43
    %v45 = vrot.slane %v40, %v44
    %v46 = vmul.f32 %v39, %v45
    %vm47 = vcmask 130048
    %v48 = vsel %vm47, %v46, 0.0
    %49 = vadd.xlane.f32.xlu0 %v48
    %v50 = vpop.xlane.xlu0 %49
    %v51 = vmul.f32 %v39, %v50
    %v52 = vlaneseq
    %v53 = vshrl.u32 %v52, 7
    %v54 = vsub.s32 0, %v53
    %v55 = vrot.slane %v41, %v54
    %v56 = vadd.f32 %v51, %v55
    %v57 = vadd.f32 %v56, %v39
    %v58 = vld [vmem:[#allocation5 + $0x1] sm:$0x1]
    %v59 = vld [vmem:[%s2 + $0x1] sm:$0x1]
    %v60 = vlaneseq
    %v61 = vshrl.u32 %v60, 7
    %v62 = vsub.s32 0, %v61
    %v63 = vrot.slane %v58, %v62
    %v64 = vmul.f32 %v57, %v63
    %v65 = vsel %vm47, %v64, 0.0
    %66 = vadd.xlane.f32.xlu0 %v65
    %v67 = vpop.xlane.xlu0 %66
    %v68 = vmul.f32 %v39, %v67
    %v69 = vlaneseq
    %v70 = vshrl.u32 %v69, 7
    %v71 = vsub.s32 0, %v70
    %v72 = vrot.slane %v59, %v71
    %v73 = vadd.f32 %v68, %v72
    %v74 = vadd.f32 %v73, %v57
    %v75 = vld [vmem:[#allocation5 + $0x2] sm:$0x1]
    %v76 = vld [vmem:[%s2 + $0x2] sm:$0x1]
    %v77 = vlaneseq
    %v78 = vshrl.u32 %v77, 7
    %v79 = vsub.s32 0, %v78
    %v80 = vrot.slane %v75, %v79
    %v81 = vmul.f32 %v74, %v80
    %v82 = vsel %vm47, %v81, 0.0
    %83 = vadd.xlane.f32.xlu0 %v82
    %v84 = vpop.xlane.xlu0 %83
    %v85 = vmul.f32 %v39, %v84
    %v86 = vlaneseq
    %v87 = vshrl.u32 %v86, 7
    %v88 = vsub.s32 0, %v87
    %v89 = vrot.slane %v76, %v88
    %v90 = vadd.f32 %v85, %v89
    %v91 = vadd.f32 %v90, %v74
    %92 = vst.msk [vmem:[#allocation7] sm:$0xff] %vm47, %v91
    // Predicated region
    $region22: #{tpu_custom_call.1} parent=1 // pred_check
      _
    $region23: #{tpu_custom_call.1} parent=1 // pred_check_branch
      %94 = sbr.rel (0) target = $region25
    $region24: #{tpu_custom_call.1} parent=1 // pred_region
      %s96 = ssub.s32 128, 128
      %97 = vsyncadd [#allocation4], %s96
      %s99 = sshll.u32 [#allocation7], 4
      %s100 = int_to_ptr.vmem [resolvable:$true] %s99
      %102 = dma.vmem_to_hbm [thread:$0]  %s100, 128, %s3, [#allocation4]
    $region25: #{tpu_custom_call.1} parent=1 // pred_fallthru
      _
    // Predicated region
    $region26: #{tpu_custom_call.1} parent=1 // pred_check
      _
    $region27: #{tpu_custom_call.1} parent=1 // pred_check_branch
      %104 = sbr.rel (0) target = $region29
    $region28: #{tpu_custom_call.1} parent=1 // pred_region
      %105 = dma.done [#allocation4], 128
    $region29: #{tpu_custom_call.1} parent=1 // pred_fallthru
      _
    %106 = vsyncpa [#allocation3], 1
    %107 = vsyncpa [#allocation6], 1
    %108 = vsyncpa [#allocation4], 1

</llo_original>
